<compile_context>
chip_gen: v7x
topology: tpu7x:2x2x1
jax: 0.10.0
libtpu: 0.0.40
codegen_flags: <defaults>
</compile_context>

<pallas_src>
import functools

import jax
import jax.numpy as jnp
from jax import lax
from jax.experimental import pallas as pl
from jax.experimental.pallas import tpu as pltpu


# ---------------------------------------------------------------------------
# Kernels
# ---------------------------------------------------------------------------
def _dsconv_kernel_packed(x_ref, dw_ref, bd_ref, shift_ref, o_ref, xp_ref, *,
                          H, W, C, C_out):
    """Lane-packed fast path (stride == 1, small C).

    x_ref     : (B_T, H, W*C)          unpadded activations (channels packed
                                        into the lane axis)
    dw_ref    : (9, W*C)               depthwise weights, pre-tiled per tap
    bd_ref    : (W*C, W*C_out)         block-diagonal pointwise weights
                                        (BN scale already folded in)
    shift_ref : (1, W*C_out)           folded BN shift, pre-tiled over W
    o_ref     : (B_T, H, W*C_out)      lane-dense output slab
    xp_ref    : (B_T, H+2, (W+2)*C)    f32 VMEM scratch (padded input)
    """
    f32 = jnp.float32
    B_T = x_ref.shape[0]
    Hp = H + 2
    WC = W * C
    WpC = (W + 2) * C
    WCo = W * C_out

    # ---- in-kernel zero padding (no jnp.pad / extra HBM pass in wrapper) ----
    zrow = jnp.zeros((B_T, 1, WpC), f32)
    xp_ref[:, 0:1, :] = zrow
    xp_ref[:, Hp - 1:Hp, :] = zrow
    zcol = jnp.zeros((B_T, Hp, C), f32)
    xp_ref[:, :, 0:C] = zcol
    xp_ref[:, :, WpC - C:WpC] = zcol
    # single f32 upcast of the whole activation block (bf16 storage friendly)
    xp_ref[:, 1:H + 1, C:C + WC] = x_ref[...].astype(f32)

    # ---- depthwise 3x3: 9 lane-dense VPU FMAs (weights pre-tiled) -----------
    acc = xp_ref[:, 0:H, 0:WC] * dw_ref[0, :]          # init with tap 0
    for t in range(1, 9):
        kh, kw = divmod(t, 3)
        acc = acc + xp_ref[:, kh:kh + H, kw * C:kw * C + WC] * dw_ref[t, :]

    # ---- pointwise 1x1 + BN scale as ONE block-diagonal matmul --------------
    # Keeps both operand and result lane-packed (no in-kernel relayout) and
    # replaces the degenerate (M,4)x(4,8) MXU shape with K=W*C, N=W*C_out.
    y = jnp.dot(acc.reshape(B_T * H, WC), bd_ref[...],
                preferred_element_type=f32)            # (B_T*H, W*C_out)
    y = jnp.maximum(y + shift_ref[0, :], 0.0)          # BN shift + ReLU

    # lane-dense store: last dim is W*C_out (128 for the demo shapes)
    o_ref[...] = y.reshape(B_T, H, WCo).astype(o_ref.dtype)


def _dsconv_kernel_unpacked(x_ref, dw_ref, pw_ref, shift_ref, o_ref, xp_ref, *,
                            H, W, C, C_out, stride):
    """Generic path (any stride, large C).

    x_ref     : (B_T, H, W, C)
    dw_ref    : (9, C)
    pw_ref    : (C, C_out)        BN scale folded in
    shift_ref : (1, C_out)
    o_ref     : (B_T, Ho, Wo, C_out)
    xp_ref    : (B_T, H+2, W+2, C) f32 VMEM scratch (padded input)
    """
    f32 = jnp.float32
    B_T = x_ref.shape[0]
    Hp, Wp = H + 2, W + 2
    Ho = (H - 1) // stride + 1
    Wo = (W - 1) // stride + 1

    # in-kernel zero padding
    z = jnp.zeros((B_T, 1, Wp, C), f32)
    xp_ref[:, 0:1, :, :] = z
    xp_ref[:, Hp - 1:Hp, :, :] = z
    z = jnp.zeros((B_T, Hp, 1, C), f32)
    xp_ref[:, :, 0:1, :] = z
    xp_ref[:, :, Wp - 1:Wp, :] = z
    xp_ref[:, 1:H + 1, 1:W + 1, :] = x_ref[...].astype(f32)

    # depthwise 3x3 accumulated directly at strided output positions
    dep = None
    for t in range(9):
        kh, kw = divmod(t, 3)
        if stride == 1:
            slab = xp_ref[:, kh:kh + Ho, kw:kw + Wo, :]
        else:
            # TODO(synk): stride>1 uses strided VMEM reads (pl.ds); this branch
            # is not exercised by the demo below -- validate on device first.
            slab = xp_ref[:, pl.ds(kh, Ho, stride), pl.ds(kw, Wo, stride), :]
        term = slab * dw_ref[t, :]
        dep = term if dep is None else dep + term

    # pointwise 1x1 (BN scale already folded into pw_ref)
    if C >= 128 and C_out >= 128:
        y = jnp.dot(dep.reshape(B_T * Ho * Wo, C), pw_ref[...],
                    preferred_element_type=f32).reshape(B_T, Ho, Wo, C_out)
    else:
        # small channel counts: C VPU FMAs instead of a degenerate MXU matmul
        y = dep[..., 0:1] * pw_ref[0, :]
        for c in range(1, C):
            y = y + dep[..., c:c + 1] * pw_ref[c, :]

    y = jnp.maximum(y + shift_ref[0, :], 0.0)
    o_ref[...] = y.astype(o_ref.dtype)


# ---------------------------------------------------------------------------
# Wrapper
# ---------------------------------------------------------------------------
def _pick_batch_tile(N, per_image_bytes, target_bytes=4 * 1024 * 1024):
    """Largest divisor of N whose block fits the per-step VMEM budget while
    keeping >= 2 grid steps when N >= 2 (so both v7x TensorCores get work)."""
    best = 1
    for d in range(1, N + 1):
        if N % d:
            continue
        if d * per_image_bytes > target_bytes:
            continue
        if N >= 2 and N // d < 2:
            continue
        best = d
    return best


def depthwise_separable_conv(x_nchw, dw_w, pw_w, gamma, beta, run_mean,
                             run_var, *, stride=1, eps=1e-5,
                             storage_dtype=jnp.float32,
                             _force_unpacked=False):
    """Forward pass matching the PyTorch DepthwiseSeparableConv module.

    x_nchw : (N, C_in, H, W)
    dw_w   : (C_in, 1, 3, 3)     depthwise conv weight (PyTorch layout)
    pw_w   : (C_out, C_in, 1, 1) pointwise conv weight (PyTorch layout)
    gamma, beta, run_mean, run_var : (C_out,) BatchNorm params / running stats
    storage_dtype : HBM storage dtype for activations (use jnp.bfloat16 on
                    v6e/v7x to halve HBM traffic; accumulation stays f32).
    returns (N, C_out, Ho, Wo)
    """
    N, C, H, W = x_nchw.shape
    C_out = pw_w.shape[0]
    Ho = (H - 1) // stride + 1
    Wo = (W - 1) // stride + 1
    f32 = jnp.float32

    # Fold eval-mode BatchNorm into the pointwise weights (scale) + a shift.
    # TODO(synk): training-mode BN (batch statistics) is not reproduced here.
    scale = (gamma.astype(f32) / jnp.sqrt(run_var.astype(f32) + eps))
    shift = beta.astype(f32) - run_mean.astype(f32) * scale
    dw9 = jnp.transpose(dw_w.reshape(C, 3, 3), (1, 2, 0)).reshape(9, C).astype(f32)
    pws = pw_w.reshape(C_out, C).T.astype(f32) * scale[None, :]        # (C, C_out)

    # NCHW -> NHWC (channels on the lane axis). No jnp.pad: the zero padding
    # happens inside the kernel, saving a full HBM round trip of the input.
    x = jnp.transpose(x_nchw, (0, 2, 3, 1)).astype(storage_dtype)

    use_packed = (stride == 1) and (C < 128) and (W * C <= 2048) \
        and not _force_unpacked

    Hp, Wp = H + 2, W + 2
    in_item = jnp.dtype(storage_dtype).itemsize
    per_img = (H * W * C * in_item * 2            # input block, double buffered
               + Ho * Wo * C_out * in_item * 2    # output block, double buffered
               + Hp * Wp * C * 4)                 # f32 padded scratch
    # TODO(synk): for very large images (e.g. 224x224x64 on v7x's 64 MiB VMEM)
    # a row-strip grid axis with a 2-row halo is needed; per-image blocks only.
    B_T = _pick_batch_tile(N, per_img)
    grid = (N // B_T,)

    vmem_limit = int(min(max(B_T * per_img * 2 + (1 << 20), 32 * 1024 * 1024),
                         64 * 1024 * 1024))
    cparams = pltpu.CompilerParams(dimension_semantics=("parallel",),
                                   vmem_limit_bytes=vmem_limit)

    if use_packed:
        x_in = x.reshape(N, H, W * C)
        dw_rows = jnp.tile(dw9, (1, W))                                # (9, W*C)
        # block-diagonal pointwise weights: bd[w*C+c, w*C_out+co] = pws[c, co]
        bd = jnp.einsum("ij,cd->icjd", jnp.eye(W, dtype=f32), pws
                        ).reshape(W * C, W * C_out)
        shift_row = jnp.tile(shift, (W,)).reshape(1, W * C_out)

        kernel = functools.partial(_dsconv_kernel_packed,
                                   H=H, W=W, C=C, C_out=C_out)
        out = pl.pallas_call(
            kernel,
            out_shape=jax.ShapeDtypeStruct((N, H, W * C_out), storage_dtype),
            grid=grid,
            in_specs=[
                pl.BlockSpec((B_T, H, W * C), lambda n: (n, 0, 0)),
                pl.BlockSpec((9, W * C), lambda n: (0, 0)),
                pl.BlockSpec((W * C, W * C_out), lambda n: (0, 0)),
                pl.BlockSpec((1, W * C_out), lambda n: (0, 0)),
            ],
            out_specs=pl.BlockSpec((B_T, H, W * C_out), lambda n: (n, 0, 0)),
            scratch_shapes=[pltpu.VMEM((B_T, Hp, Wp * C), f32)],
            compiler_params=cparams,
        )(x_in, dw_rows, bd, shift_row)
        out = out.reshape(N, H, W, C_out)
    else:
        shift_row = shift.reshape(1, C_out)
        kernel = functools.partial(_dsconv_kernel_unpacked,
                                   H=H, W=W, C=C, C_out=C_out, stride=stride)
        out = pl.pallas_call(
            kernel,
            out_shape=jax.ShapeDtypeStruct((N, Ho, Wo, C_out), storage_dtype),
            grid=grid,
            in_specs=[
                pl.BlockSpec((B_T, H, W, C), lambda n: (n, 0, 0, 0)),
                pl.BlockSpec((9, C), lambda n: (0, 0)),
                pl.BlockSpec((C, C_out), lambda n: (0, 0)),
                pl.BlockSpec((1, C_out), lambda n: (0, 0)),
            ],
            out_specs=pl.BlockSpec((B_T, Ho, Wo, C_out),
                                   lambda n: (n, 0, 0, 0)),
            scratch_shapes=[pltpu.VMEM((B_T, Hp, Wp, C), f32)],
            compiler_params=cparams,
        )(x, dw9, pws, shift_row)

    return jnp.transpose(out, (0, 3, 1, 2))   # NHWC -> NCHW


# ---------------------------------------------------------------------------
# Pure-JAX reference (lax conv) for correctness checking
# ---------------------------------------------------------------------------
def _reference(x_nchw, dw_w, pw_w, gamma, beta, run_mean, run_var,
               *, stride=1, eps=1e-5):
    C_in = x_nchw.shape[1]
    C_out = pw_w.shape[0]
    x = jnp.transpose(x_nchw, (0, 2, 3, 1))                   # NHWC
    dw_hwio = jnp.transpose(dw_w, (2, 3, 1, 0))               # (3,3,1,C_in)
    dep = lax.conv_general_dilated(
        x, dw_hwio, window_strides=(stride, stride),
        padding=((1, 1), (1, 1)),
        dimension_numbers=("NHWC", "HWIO", "NHWC"),
        feature_group_count=C_in)
    pwm = pw_w.reshape(C_out, C_in)
    y = jnp.einsum("nhwc,oc->nhwo", dep, pwm)
    scale = gamma / jnp.sqrt(run_var + eps)
    shift = beta - run_mean * scale
    y = jnp.maximum(y * scale + shift, 0.0)
    return jnp.transpose(y, (0, 3, 1, 2))                     # NCHW


if __name__ == "__main__":
    key = jax.random.PRNGKey(0)
    k1, k2, k3, k4, k5, k6, k7 = jax.random.split(key, 7)

    N, C_in, C_out, H, W = 2, 4, 8, 16, 16

    x = jax.random.normal(k1, (N, C_in, H, W), jnp.float32)
    dw_w = jax.random.normal(k2, (C_in, 1, 3, 3), jnp.float32) * 0.2
    pw_w = jax.random.normal(k3, (C_out, C_in, 1, 1), jnp.float32) * 0.2
    gamma = 1.0 + 0.1 * jax.random.normal(k4, (C_out,), jnp.float32)
    beta = 0.1 * jax.random.normal(k5, (C_out,), jnp.float32)
    run_mean = 0.05 * jax.random.normal(k6, (C_out,), jnp.float32)
    run_var = 1.0 + 0.1 * jnp.abs(jax.random.normal(k7, (C_out,), jnp.float32))

    ref = _reference(x, dw_w, pw_w, gamma, beta, run_mean, run_var, stride=1)

    # 1) lane-packed fast path, float32 storage (pointwise goes through the
    #    MXU, which may use bf16 internal passes -> slightly loose tolerance).
    out = depthwise_separable_conv(x, dw_w, pw_w, gamma, beta, run_mean,
                                   run_var, stride=1)
    out = jax.block_until_ready(out)
    assert out.shape == ref.shape == (N, C_out, H, W)
    assert jnp.allclose(out, ref, atol=2e-2, rtol=2e-2), "packed f32 mismatch"

    # 2) same path with bfloat16 activation storage (v6e/v7x HBM-traffic win)
    out_bf16 = depthwise_separable_conv(x, dw_w, pw_w, gamma, beta, run_mean,
                                        run_var, stride=1,
                                        storage_dtype=jnp.bfloat16)
    out_bf16 = jax.block_until_ready(out_bf16).astype(jnp.float32)
    assert jnp.allclose(out_bf16, ref, atol=5e-2, rtol=5e-2), "bf16 mismatch"

    # 3) generic (unpacked) path, float32, pure-VPU pointwise -> tight check
    out_g = depthwise_separable_conv(x, dw_w, pw_w, gamma, beta, run_mean,
                                     run_var, stride=1, _force_unpacked=True)
    out_g = jax.block_until_ready(out_g)
    assert jnp.allclose(out_g, ref, atol=1e-4, rtol=1e-4), "unpacked mismatch"

    print("KERNEL_OK")
</pallas_src>

<mosaic_0001>
module attributes {stable_mosaic.version = 11 : i64} {
  func.func @_dsconv_kernel_packed(%arg0: i32, %arg1: memref<1x16x64xf32, #tpu.memory_space<vmem>>, %arg2: memref<9x64xf32, #tpu.memory_space<vmem>>, %arg3: memref<64x128xf32, #tpu.memory_space<vmem>>, %arg4: memref<1x128xf32, #tpu.memory_space<vmem>>, %arg5: memref<1x16x128xf32, #tpu.memory_space<vmem>>, %arg6: memref<1x18x72xf32, #tpu.memory_space<vmem>>) attributes {dimension_semantics = [#tpu.dimension_semantics<parallel>], iteration_bounds = array<i64: 2>, scalar_prefetch = 0 : i64, scratch_operands = 1 : i64, tpu.core_type = #tpu.core_type<tc>, window_params = [{transform_indices = @transform_0, window_bounds = array<i64: 1, 16, 64>}, {pipeline_mode = #tpu.pipeline_mode<synchronous>, transform_indices = @transform_1, window_bounds = array<i64: 9, 64>}, {pipeline_mode = #tpu.pipeline_mode<synchronous>, transform_indices = @transform_2, window_bounds = array<i64: 64, 128>}, {pipeline_mode = #tpu.pipeline_mode<synchronous>, transform_indices = @transform_3, window_bounds = array<i64: 1, 128>}, {transform_indices = @transform_4, window_bounds = array<i64: 1, 16, 128>}]} {
    %cst = arith.constant 0.000000e+00 : f32
    %0 = vector.broadcast %cst : f32 to vector<1x1x72xf32>
    %c0 = arith.constant 0 : index
    %c0_0 = arith.constant 0 : index
    %c0_1 = arith.constant 0 : index
    %1 = vector.load %arg6[%c0, %c0_0, %c0_1] : memref<1x18x72xf32, #tpu.memory_space<vmem>>, vector<1x1x72xf32>
    tpu.vector_store %arg6[%c0, %c0_0, %c0_1], %0 {strides = array<i32>} : memref<1x18x72xf32, #tpu.memory_space<vmem>>, vector<1x1x72xf32>,
    %c0_2 = arith.constant 0 : index
    %c17 = arith.constant 17 : index
    %c0_3 = arith.constant 0 : index
    %2 = vector.load %arg6[%c0_2, %c17, %c0_3] : memref<1x18x72xf32, #tpu.memory_space<vmem>>, vector<1x1x72xf32>
    tpu.vector_store %arg6[%c0_2, %c17, %c0_3], %0 {strides = array<i32>} : memref<1x18x72xf32, #tpu.memory_space<vmem>>, vector<1x1x72xf32>,
    %cst_4 = arith.constant 0.000000e+00 : f32
    %3 = vector.broadcast %cst_4 : f32 to vector<1x18x4xf32>
    %c0_5 = arith.constant 0 : index
    %c0_6 = arith.constant 0 : index
    %c0_7 = arith.constant 0 : index
    %4 = vector.load %arg6[%c0_5, %c0_6, %c0_7] : memref<1x18x72xf32, #tpu.memory_space<vmem>>, vector<1x18x4xf32>
    tpu.vector_store %arg6[%c0_5, %c0_6, %c0_7], %3 {strides = array<i32>} : memref<1x18x72xf32, #tpu.memory_space<vmem>>, vector<1x18x4xf32>,
    %c0_8 = arith.constant 0 : index
    %c0_9 = arith.constant 0 : index
    %c68 = arith.constant 68 : index
    %5 = vector.load %arg6[%c0_8, %c0_9, %c68] : memref<1x18x72xf32, #tpu.memory_space<vmem>>, vector<1x18x4xf32>
    tpu.vector_store %arg6[%c0_8, %c0_9, %c68], %3 {strides = array<i32>} : memref<1x18x72xf32, #tpu.memory_space<vmem>>, vector<1x18x4xf32>,
    %c0_10 = arith.constant 0 : index
    %c0_11 = arith.constant 0 : index
    %c0_12 = arith.constant 0 : index
    %6 = vector.load %arg1[%c0_10, %c0_11, %c0_12] : memref<1x16x64xf32, #tpu.memory_space<vmem>>, vector<1x16x64xf32>
    %c0_13 = arith.constant 0 : index
    %c1 = arith.constant 1 : index
    %c4 = arith.constant 4 : index
    %7 = vector.load %arg6[%c0_13, %c1, %c4] : memref<1x18x72xf32, #tpu.memory_space<vmem>>, vector<1x16x64xf32>
    tpu.vector_store %arg6[%c0_13, %c1, %c4], %6 {strides = array<i32>} : memref<1x18x72xf32, #tpu.memory_space<vmem>>, vector<1x16x64xf32>,
    %c0_14 = arith.constant 0 : index
    %c0_15 = arith.constant 0 : index
    %c0_16 = arith.constant 0 : index
    %8 = vector.load %arg6[%c0_14, %c0_15, %c0_16] : memref<1x18x72xf32, #tpu.memory_space<vmem>>, vector<1x16x64xf32>
    %c0_17 = arith.constant 0 : index
    %c0_18 = arith.constant 0 : index
    %9 = vector.load %arg2[%c0_17, %c0_18] : memref<9x64xf32, #tpu.memory_space<vmem>>, vector<1x64xf32>
    %10 = vector.shape_cast %9 : vector<1x64xf32> to vector<64xf32>
    %11 = vector.shape_cast %10 : vector<64xf32> to vector<1x1x64xf32>
    %12 = vector.broadcast %11 : vector<1x1x64xf32> to vector<1x16x64xf32>
    %13 = arith.mulf %8, %12 : vector<1x16x64xf32>
    %c0_19 = arith.constant 0 : index
    %c0_20 = arith.constant 0 : index
    %c4_21 = arith.constant 4 : index
    %14 = vector.load %arg6[%c0_19, %c0_20, %c4_21] : memref<1x18x72xf32, #tpu.memory_space<vmem>>, vector<1x16x64xf32>
    %c1_22 = arith.constant 1 : index
    %c0_23 = arith.constant 0 : index
    %15 = vector.load %arg2[%c1_22, %c0_23] : memref<9x64xf32, #tpu.memory_space<vmem>>, vector<1x64xf32>
    %16 = vector.shape_cast %15 : vector<1x64xf32> to vector<64xf32>
    %17 = vector.shape_cast %16 : vector<64xf32> to vector<1x1x64xf32>
    %18 = vector.broadcast %17 : vector<1x1x64xf32> to vector<1x16x64xf32>
    %19 = arith.mulf %14, %18 : vector<1x16x64xf32>
    %20 = arith.addf %13, %19 : vector<1x16x64xf32>
    %c0_24 = arith.constant 0 : index
    %c0_25 = arith.constant 0 : index
    %c8 = arith.constant 8 : index
    %21 = vector.load %arg6[%c0_24, %c0_25, %c8] : memref<1x18x72xf32, #tpu.memory_space<vmem>>, vector<1x16x64xf32>
    %c2 = arith.constant 2 : index
    %c0_26 = arith.constant 0 : index
    %22 = vector.load %arg2[%c2, %c0_26] : memref<9x64xf32, #tpu.memory_space<vmem>>, vector<1x64xf32>
    %23 = vector.shape_cast %22 : vector<1x64xf32> to vector<64xf32>
    %24 = vector.shape_cast %23 : vector<64xf32> to vector<1x1x64xf32>
    %25 = vector.broadcast %24 : vector<1x1x64xf32> to vector<1x16x64xf32>
    %26 = arith.mulf %21, %25 : vector<1x16x64xf32>
    %27 = arith.addf %20, %26 : vector<1x16x64xf32>
    %c0_27 = arith.constant 0 : index
    %c1_28 = arith.constant 1 : index
    %c0_29 = arith.constant 0 : index
    %28 = vector.load %arg6[%c0_27, %c1_28, %c0_29] : memref<1x18x72xf32, #tpu.memory_space<vmem>>, vector<1x16x64xf32>
    %c3 = arith.constant 3 : index
    %c0_30 = arith.constant 0 : index
    %29 = vector.load %arg2[%c3, %c0_30] : memref<9x64xf32, #tpu.memory_space<vmem>>, vector<1x64xf32>
    %30 = vector.shape_cast %29 : vector<1x64xf32> to vector<64xf32>
    %31 = vector.shape_cast %30 : vector<64xf32> to vector<1x1x64xf32>
    %32 = vector.broadcast %31 : vector<1x1x64xf32> to vector<1x16x64xf32>
    %33 = arith.mulf %28, %32 : vector<1x16x64xf32>
    %34 = arith.addf %27, %33 : vector<1x16x64xf32>
    %c0_31 = arith.constant 0 : index
    %c1_32 = arith.constant 1 : index
    %c4_33 = arith.constant 4 : index
    %35 = vector.load %arg6[%c0_31, %c1_32, %c4_33] : memref<1x18x72xf32, #tpu.memory_space<vmem>>, vector<1x16x64xf32>
    %c4_34 = arith.constant 4 : index
    %c0_35 = arith.constant 0 : index
    %36 = vector.load %arg2[%c4_34, %c0_35] : memref<9x64xf32, #tpu.memory_space<vmem>>, vector<1x64xf32>
    %37 = vector.shape_cast %36 : vector<1x64xf32> to vector<64xf32>
    %38 = vector.shape_cast %37 : vector<64xf32> to vector<1x1x64xf32>
    %39 = vector.broadcast %38 : vector<1x1x64xf32> to vector<1x16x64xf32>
    %40 = arith.mulf %35, %39 : vector<1x16x64xf32>
    %41 = arith.addf %34, %40 : vector<1x16x64xf32>
    %c0_36 = arith.constant 0 : index
    %c1_37 = arith.constant 1 : index
    %c8_38 = arith.constant 8 : index
    %42 = vector.load %arg6[%c0_36, %c1_37, %c8_38] : memref<1x18x72xf32, #tpu.memory_space<vmem>>, vector<1x16x64xf32>
    %c5 = arith.constant 5 : index
    %c0_39 = arith.constant 0 : index
    %43 = vector.load %arg2[%c5, %c0_39] : memref<9x64xf32, #tpu.memory_space<vmem>>, vector<1x64xf32>
    %44 = vector.shape_cast %43 : vector<1x64xf32> to vector<64xf32>
    %45 = vector.shape_cast %44 : vector<64xf32> to vector<1x1x64xf32>
    %46 = vector.broadcast %45 : vector<1x1x64xf32> to vector<1x16x64xf32>
    %47 = arith.mulf %42, %46 : vector<1x16x64xf32>
    %48 = arith.addf %41, %47 : vector<1x16x64xf32>
    %c0_40 = arith.constant 0 : index
    %c2_41 = arith.constant 2 : index
    %c0_42 = arith.constant 0 : index
    %49 = vector.load %arg6[%c0_40, %c2_41, %c0_42] : memref<1x18x72xf32, #tpu.memory_space<vmem>>, vector<1x16x64xf32>
    %c6 = arith.constant 6 : index
    %c0_43 = arith.constant 0 : index
    %50 = vector.load %arg2[%c6, %c0_43] : memref<9x64xf32, #tpu.memory_space<vmem>>, vector<1x64xf32>
    %51 = vector.shape_cast %50 : vector<1x64xf32> to vector<64xf32>
    %52 = vector.shape_cast %51 : vector<64xf32> to vector<1x1x64xf32>
    %53 = vector.broadcast %52 : vector<1x1x64xf32> to vector<1x16x64xf32>
    %54 = arith.mulf %49, %53 : vector<1x16x64xf32>
    %55 = arith.addf %48, %54 : vector<1x16x64xf32>
    %c0_44 = arith.constant 0 : index
    %c2_45 = arith.constant 2 : index
    %c4_46 = arith.constant 4 : index
    %56 = vector.load %arg6[%c0_44, %c2_45, %c4_46] : memref<1x18x72xf32, #tpu.memory_space<vmem>>, vector<1x16x64xf32>
    %c7 = arith.constant 7 : index
    %c0_47 = arith.constant 0 : index
    %57 = vector.load %arg2[%c7, %c0_47] : memref<9x64xf32, #tpu.memory_space<vmem>>, vector<1x64xf32>
    %58 = vector.shape_cast %57 : vector<1x64xf32> to vector<64xf32>
    %59 = vector.shape_cast %58 : vector<64xf32> to vector<1x1x64xf32>
    %60 = vector.broadcast %59 : vector<1x1x64xf32> to vector<1x16x64xf32>
    %61 = arith.mulf %56, %60 : vector<1x16x64xf32>
    %62 = arith.addf %55, %61 : vector<1x16x64xf32>
    %c0_48 = arith.constant 0 : index
    %c2_49 = arith.constant 2 : index
    %c8_50 = arith.constant 8 : index
    %63 = vector.load %arg6[%c0_48, %c2_49, %c8_50] : memref<1x18x72xf32, #tpu.memory_space<vmem>>, vector<1x16x64xf32>
    %c8_51 = arith.constant 8 : index
    %c0_52 = arith.constant 0 : index
    %64 = vector.load %arg2[%c8_51, %c0_52] : memref<9x64xf32, #tpu.memory_space<vmem>>, vector<1x64xf32>
    %65 = vector.shape_cast %64 : vector<1x64xf32> to vector<64xf32>
    %66 = vector.shape_cast %65 : vector<64xf32> to vector<1x1x64xf32>
    %67 = vector.broadcast %66 : vector<1x1x64xf32> to vector<1x16x64xf32>
    %68 = arith.mulf %63, %67 : vector<1x16x64xf32>
    %69 = arith.addf %62, %68 : vector<1x16x64xf32>
    %70 = vector.shape_cast %69 : vector<1x16x64xf32> to vector<16x64xf32>
    %c0_53 = arith.constant 0 : index
    %c0_54 = arith.constant 0 : index
    %71 = vector.load %arg3[%c0_53, %c0_54] : memref<64x128xf32, #tpu.memory_space<vmem>>, vector<64x128xf32>
    %cst_55 = arith.constant dense<0.000000e+00> : vector<16x128xf32>
    %72 = tpu.matmul %70, %71, %cst_55 {dimension_numbers = #tpu.dot_dimension_numbers<[1], [0], [0], [1], [0, 0, 1, 1], [], []>} : vector<16x64xf32>, vector<64x128xf32>, vector<16x128xf32> -> vector<16x128xf32>
    %c0_56 = arith.constant 0 : index
    %c0_57 = arith.constant 0 : index
    %73 = vector.load %arg4[%c0_56, %c0_57] : memref<1x128xf32, #tpu.memory_space<vmem>>, vector<1x128xf32>
    %74 = vector.shape_cast %73 : vector<1x128xf32> to vector<128xf32>
    %75 = vector.shape_cast %74 : vector<128xf32> to vector<1x128xf32>
    %76 = vector.broadcast %75 : vector<1x128xf32> to vector<16x128xf32>
    %77 = arith.addf %72, %76 : vector<16x128xf32>
    %cst_58 = arith.constant 0.000000e+00 : f32
    %78 = vector.broadcast %cst_58 : f32 to vector<16x128xf32>
    %79 = arith.maximumf %77, %78 : vector<16x128xf32>
    %80 = vector.shape_cast %79 : vector<16x128xf32> to vector<1x16x128xf32>
    %c0_59 = arith.constant 0 : index
    %c0_60 = arith.constant 0 : index
    %c0_61 = arith.constant 0 : index
    %81 = vector.load %arg5[%c0_59, %c0_60, %c0_61] : memref<1x16x128xf32, #tpu.memory_space<vmem>>, vector<1x16x128xf32>
    tpu.vector_store %arg5[%c0_59, %c0_60, %c0_61], %80 {strides = array<i32>} : memref<1x16x128xf32, #tpu.memory_space<vmem>>, vector<1x16x128xf32>,
    return
  }
  func.func @transform_0(%arg0: i32) -> (i32, i32, i32) {
    %c0_i32 = arith.constant 0 : i32
    %c0_i32_0 = arith.constant 0 : i32
    %c0_i32_1 = arith.constant 0 : i32
    return %arg0, %c0_i32, %c0_i32_0 : i32, i32, i32
  }
  func.func @transform_1(%arg0: i32) -> (i32, i32) {
    %c0_i32 = arith.constant 0 : i32
    %c0_i32_0 = arith.constant 0 : i32
    %c0_i32_1 = arith.constant 0 : i32
    return %c0_i32, %c0_i32_0 : i32, i32
  }
  func.func @transform_2(%arg0: i32) -> (i32, i32) {
    %c0_i32 = arith.constant 0 : i32
    %c0_i32_0 = arith.constant 0 : i32
    %c0_i32_1 = arith.constant 0 : i32
    return %c0_i32, %c0_i32_0 : i32, i32
  }
  func.func @transform_3(%arg0: i32) -> (i32, i32) {
    %c0_i32 = arith.constant 0 : i32
    %c0_i32_0 = arith.constant 0 : i32
    %c0_i32_1 = arith.constant 0 : i32
    return %c0_i32, %c0_i32_0 : i32, i32
  }
  func.func @transform_4(%arg0: i32) -> (i32, i32, i32) {
    %c0_i32 = arith.constant 0 : i32
    %c0_i32_0 = arith.constant 0 : i32
    %c0_i32_1 = arith.constant 0 : i32
    return %arg0, %c0_i32, %c0_i32_0 : i32, i32, i32
  }
}

</mosaic_0001>

<llo_original>
// kernel: tpu_custom_call.1
$region0: #{tpu_custom_call.1}
  #allocation0 [shape = 'u32[]', space=smem, size = 0x4, offset = 0x4, fixed_abs, tag = 'smem constant byte address 0x4 - core index']
  #allocation1 [shape = 'u32[144,128]{1,0:T(1,128)}', space=vmem, size = 0x12000, scoped, tag = 'internal scratch']
  #allocation2 [shape = 'f32[1,18,72]{2,1,0:T(8,128)}', space=vmem, size = 0x3000, scoped, tag = 'scratch operand']
  %s0 = inlined_call_operand.hbm [shape: f32[2,16,64], index: 0, kind: input, shape index: {}]
  %s1 = inlined_call_operand.hbm [shape: f32[9,64], index: 1, kind: input, shape index: {}]
  %s2 = inlined_call_operand.hbm [shape: f32[64,128], index: 2, kind: input, shape index: {}]
  %s3 = inlined_call_operand.vmem [shape: f32[1,128], index: 3, kind: input, shape index: {}]
  %s4 = inlined_call_operand.hbm [shape: f32[2,16,128], index: 4, kind: output, shape index: {}]
  %s5 = sld [smem:[#allocation0]]
  $region61: #{tpu_custom_call.1} parent=0
    _
  %s7 = ssub.s32 1, %s5
  %s8 = scalar_select 0, %s7, %s5
  $region1: #{tpu_custom_call.1} parent=0
    #allocation3 [shape = 'u8[16384]{0}', space=vmem, size = 0x4000, scoped, tag = 'input window, operand 0']
    #allocation4 [shape = 's32[2]{0}', space=sflag, size = 0x8, scoped, tag = 'scoped memory for tpu_custom_call.1']
    #allocation5 [shape = 's32[2]{0}', space=sflag, size = 0x8, scoped, tag = 'scoped memory for tpu_custom_call.1']
    #allocation6 [shape = 'u8[8192]{0}', space=vmem, size = 0x2000, scoped, tag = 'input window, operand 1, single buffered']
    #allocation7 [shape = 's32[1]{0}', space=sflag, size = 0x4, scoped, tag = 'scoped memory for tpu_custom_call.1']
    #allocation8 [shape = 'u8[32768]{0}', space=vmem, size = 0x8000, scoped, tag = 'input window, operand 2, single buffered']
    #allocation9 [shape = 'u8[16384]{0}', space=vmem, size = 0x4000, scoped, tag = 'output window, operand 0']
    %9 = vsyncpa [#allocation4], 0
    %s10 = scalar_lea.sflag [#allocation4], 1
    %11 = vsyncpa %s10, 0
    %12 = vsyncpa [#allocation7], 0
    %13 = vsyncpa [#allocation5], 0
    %s14 = scalar_lea.sflag [#allocation5], 1
    %15 = vsyncpa %s14, 0
    loop: start=0, step=1, limit=4
    $region2: #{tpu_custom_call.1} parent=1 // loop_pre_header
      _
    $region3: #{tpu_custom_call.1} parent=1 // loop_header
      %s17 = sphi 0, %s21
      %p18 = scmp.ge.s32.totalorder %s17, 4
      %s27 = sphi 0, %s29
      %s30 = sphi 0, %s27
      %s31 = sphi 0, %s30
      %s47 = sphi 0, %s31
      %s51 = sphi 0, %s51
      %s53 = sphi 0, %s51
      %s54 = sphi 0, %s53
      %s68 = sphi 0, %s54
      %s72 = sphi 0, %s72
      %s74 = sphi 0, %s72
      %s75 = sphi 0, %s74
      %s89 = sphi 0, %s75
      %s93 = sphi 0, %s93
      %s95 = sphi 0, %s93
      %s96 = sphi 0, %s95
      %s110 = sphi 0, %s96
      %s116 = sphi 0, %s118
      %s119 = sphi 0, %s116
      %s120 = sphi 0, %s119
      %s136 = sphi 0, %s120
    $region4: #{tpu_custom_call.1} parent=1 // loop_header_branch
      %20 = sbr.rel (%p18) target = $region8
    $region5: #{tpu_custom_call.1} parent=1 // loop_body
      %s22 = ssub.s32 %s17, 1
      %s23 = ssub.s32 %s17, 2
      %s24 = sadd.s32 %s17, 1
      %s25 = ssub.s32 %s17, %s24
      %p26 = scmp.eq.s32.totalorder %s25, 0
      %s28 = sadd.s32 %s27, 1
      %s29 = scalar_select %p26, %s27, %s28
      %p32 = pneg %p26
      %p33 = scmp.eq.s32.totalorder %s17, 1
      %p34 = por %p32, %p33
      %p35 = scmp.ne.s32.totalorder %s27, %s30
      %p36 = scmp.eq.s32.totalorder %s17, 0
      %p37 = por %p35, %p36
      %p38 = scmp.ne.s32.totalorder %s27, %s30
      %p39 = scmp.eq.s32.totalorder %s22, 1
      %p40 = por %p38, %p39
      %p41 = scmp.ne.s32.totalorder %s30, %s31
      %p42 = scmp.eq.s32.totalorder %s22, 0
      %p43 = por %p41, %p42
      %p44 = scmp.ne.s32.totalorder %s30, %s31
      %p45 = scmp.eq.s32.totalorder %s23, 1
      %p46 = por %p44, %p45
      %p48 = scmp.ne.s32.totalorder %s31, %s47
      %p49 = scmp.eq.s32.totalorder %s23, 0
      %p50 = por %p48, %p49
      %s52 = sadd.s32 %s51, 1
      %p55 = scmp.eq.s32.totalorder %s17, 1
      %p56 = scmp.ne.s32.totalorder %s51, %s53
      %p57 = scmp.eq.s32.totalorder %s17, 0
      %p58 = por %p56, %p57
      %p59 = scmp.ne.s32.totalorder %s51, %s53
      %p60 = scmp.eq.s32.totalorder %s22, 1
      %p61 = por %p59, %p60
      %p62 = scmp.ne.s32.totalorder %s53, %s54
      %p63 = scmp.eq.s32.totalorder %s22, 0
      %p64 = por %p62, %p63
      %p65 = scmp.ne.s32.totalorder %s53, %s54
      %p66 = scmp.eq.s32.totalorder %s23, 1
      %p67 = por %p65, %p66
      %p69 = scmp.ne.s32.totalorder %s54, %s68
      %p70 = scmp.eq.s32.totalorder %s23, 0
      %p71 = por %p69, %p70
      %s73 = sadd.s32 %s72, 1
      %p76 = scmp.eq.s32.totalorder %s17, 1
      %p77 = scmp.ne.s32.totalorder %s72, %s74
      %p78 = scmp.eq.s32.totalorder %s17, 0
      %p79 = por %p77, %p78
      %p80 = scmp.ne.s32.totalorder %s72, %s74
      %p81 = scmp.eq.s32.totalorder %s22, 1
      %p82 = por %p80, %p81
      %p83 = scmp.ne.s32.totalorder %s74, %s75
      %p84 = scmp.eq.s32.totalorder %s22, 0
      %p85 = por %p83, %p84
      %p86 = scmp.ne.s32.totalorder %s74, %s75
      %p87 = scmp.eq.s32.totalorder %s23, 1
      %p88 = por %p86, %p87
      %p90 = scmp.ne.s32.totalorder %s75, %s89
      %p91 = scmp.eq.s32.totalorder %s23, 0
      %p92 = por %p90, %p91
      %s94 = sadd.s32 %s93, 1
      %p97 = scmp.eq.s32.totalorder %s17, 1
      %p98 = scmp.ne.s32.totalorder %s93, %s95
      %p99 = scmp.eq.s32.totalorder %s17, 0
      %p100 = por %p98, %p99
      %p101 = scmp.ne.s32.totalorder %s93, %s95
      %p102 = scmp.eq.s32.totalorder %s22, 1
      %p103 = por %p101, %p102
      %p104 = scmp.ne.s32.totalorder %s95, %s96
      %p105 = scmp.eq.s32.totalorder %s22, 0
      %p106 = por %p104, %p105
      %p107 = scmp.ne.s32.totalorder %s95, %s96
      %p108 = scmp.eq.s32.totalorder %s23, 1
      %p109 = por %p107, %p108
      %p111 = scmp.ne.s32.totalorder %s96, %s110
      %p112 = scmp.eq.s32.totalorder %s23, 0
      %p113 = por %p111, %p112
      %s114 = ssub.s32 %s17, %s24
      %p115 = scmp.eq.s32.totalorder %s114, 0
      %s117 = sadd.s32 %s116, 1
      %s118 = scalar_select %p115, %s116, %s117
      %p121 = pneg %p115
      %p122 = scmp.eq.s32.totalorder %s17, 1
      %p123 = por %p121, %p122
      %p124 = scmp.ne.s32.totalorder %s116, %s119
      %p125 = scmp.eq.s32.totalorder %s17, 0
      %p126 = por %p124, %p125
      %p127 = scmp.ne.s32.totalorder %s116, %s119
      %p128 = scmp.eq.s32.totalorder %s22, 1
      %p129 = por %p127, %p128
      %p130 = scmp.ne.s32.totalorder %s119, %s120
      %p131 = scmp.eq.s32.totalorder %s22, 0
      %p132 = por %p130, %p131
      %p133 = scmp.ne.s32.totalorder %s119, %s120
      %p134 = scmp.eq.s32.totalorder %s23, 1
      %p135 = por %p133, %p134
      %p137 = scmp.ne.s32.totalorder %s120, %s136
      %p138 = scmp.eq.s32.totalorder %s23, 0
      %p139 = por %p137, %p138
      %p140 = scmp.le.s32.totalorder 1, %s17
      %p141 = scmp.lt.s32.totalorder %s17, 3
      %p142 = pnand %p140, %p141
      %p143 = pneg %p142
      // Predicated region
      $region9: #{tpu_custom_call.1} parent=5 // pred_check
        _
      $region10: #{tpu_custom_call.1} parent=5 // pred_check_branch
        %145 = sbr.rel (%p142) target = $region12
      $region11: #{tpu_custom_call.1} parent=5 // pred_region
        %s146 = ssub.s32 %s17, 1
        // Predicated region
        $region13: #{tpu_custom_call.1} parent=11 // pred_check
          %p147 = pneg %p64
        $region14: #{tpu_custom_call.1} parent=11 // pred_check_branch
          %149 = sbr.rel (%p147) target = $region16
        $region15: #{tpu_custom_call.1} parent=11 // pred_region
          %s151 = ssub.s32 256, 256
          %152 = vsyncadd [#allocation7], %s151
          %s153 = sshll.u32 [#allocation6], 4
          %s154 = int_to_ptr.vmem [resolvable:$true] %s153
          %159 = dma.hbm_to_vmem [thread:$0]  %s1, 256, %s154, [#allocation7], 128, 128, 8
        $region16: #{tpu_custom_call.1} parent=11 // pred_fallthru
          _
        // Predicated region
        $region17: #{tpu_custom_call.1} parent=11 // pred_check
          %p160 = pneg %p85
        $region18: #{tpu_custom_call.1} parent=11 // pred_check_branch
          %162 = sbr.rel (%p160) target = $region20
        $region19: #{tpu_custom_call.1} parent=11 // pred_region
          %s164 = ssub.s32 1024, 1024
          %165 = vsyncadd [#allocation7], %s164
          %s166 = sshll.u32 [#allocation8], 4
          %s167 = int_to_ptr.vmem [resolvable:$true] %s166
          %172 = dma.hbm_to_vmem [thread:$0]  %s2, 1024, %s167, [#allocation7], 128, 128, 8
        $region20: #{tpu_custom_call.1} parent=11 // pred_fallthru
          _
        // Predicated region
        $region21: #{tpu_custom_call.1} parent=11 // pred_check
          %p173 = pneg %p106
        $region22: #{tpu_custom_call.1} parent=11 // pred_check_branch
          %175 = sbr.rel (%p173) target = $region24
        $region23: #{tpu_custom_call.1} parent=11 // pred_region
          _
        $region24: #{tpu_custom_call.1} parent=11 // pred_fallthru
          _
      $region12: #{tpu_custom_call.1} parent=5 // pred_fallthru
        _
      %p176 = scmp.lt.s32.totalorder %s17, 2
      // Predicated region
      $region25: #{tpu_custom_call.1} parent=5 // pred_check
        %p177 = pneg %p176
      $region26: #{tpu_custom_call.1} parent=5 // pred_check_branch
        %179 = sbr.rel (%p177) target = $region28
      $region27: #{tpu_custom_call.1} parent=5 // pred_region
        // Predicated region
        $region29: #{tpu_custom_call.1} parent=27 // pred_check
          %p180 = pneg %p37
        $region30: #{tpu_custom_call.1} parent=27 // pred_check_branch
          %182 = sbr.rel (%p180) target = $region32
        $region31: #{tpu_custom_call.1} parent=27 // pred_region
          %s183 = sand.u32 %s27, 1
          %s184 = scalar_lea.sflag [#allocation4], %s183
          %s185 = sand.u32 %s27, 1
          %s186 = smul.addr %s185, 16
          %s187 = scalar_lea.vmem [#allocation3], %s186
          %s189 = ssub.s32 256, 256
          %190 = vsyncadd %s184, %s189
          %s191 = smul.addr %s17, 2
          %s192 = smul.addr %s191, 128
          %s193 = scalar_lea.hbm %s0, %s192
          %s194 = sshll.u32 %s187, 4
          %s195 = int_to_ptr.vmem [resolvable:$true] %s194
          %200 = dma.hbm_to_vmem [thread:$0]  %s193, 256, %s195, %s184, 128, 128, 8
        $region32: #{tpu_custom_call.1} parent=27 // pred_fallthru
          _
      $region28: #{tpu_custom_call.1} parent=5 // pred_fallthru
        _
      %p201 = scmp.le.s32.totalorder 1, %s17
      %p202 = scmp.lt.s32.totalorder %s17, 3
      %p203 = pnand %p201, %p202
      %p204 = pneg %p203
      // Predicated region
      $region33: #{tpu_custom_call.1} parent=5 // pred_check
        _
      $region34: #{tpu_custom_call.1} parent=5 // pred_check_branch
        %206 = sbr.rel (%p203) target = $region36
      $region35: #{tpu_custom_call.1} parent=5 // pred_region
        %s207 = ssub.s32 %s17, 1
        %s208 = sand.u32 %s30, 1
        %s209 = scalar_lea.sflag [#allocation4], %s208
        %s210 = sand.u32 %s30, 1
        %s211 = smul.addr %s210, 16
        %s212 = scalar_lea.vmem [#allocation3], %s211
        // Predicated region
        $region37: #{tpu_custom_call.1} parent=35 // pred_check
          %p213 = pneg %p43
        $region38: #{tpu_custom_call.1} parent=35 // pred_check_branch
          %215 = sbr.rel (%p213) target = $region40
        $region39: #{tpu_custom_call.1} parent=35 // pred_region
          %216 = dma.done %s209, 256
        $region40: #{tpu_custom_call.1} parent=35 // pred_fallthru
          _
        // Predicated region
        $region41: #{tpu_custom_call.1} parent=35 // pred_check
          %p217 = pneg %p64
        $region42: #{tpu_custom_call.1} parent=35 // pred_check_branch
          %219 = sbr.rel (%p217) target = $region44
        $region43: #{tpu_custom_call.1} parent=35 // pred_region
          %220 = dma.done [#allocation7], 256
        $region44: #{tpu_custom_call.1} parent=35 // pred_fallthru
          _
        // Predicated region
        $region45: #{tpu_custom_call.1} parent=35 // pred_check
          %p221 = pneg %p85
        $region46: #{tpu_custom_call.1} parent=35 // pred_check_branch
          %223 = sbr.rel (%p221) target = $region48
        $region47: #{tpu_custom_call.1} parent=35 // pred_region
          %224 = dma.done [#allocation7], 1024
        $region48: #{tpu_custom_call.1} parent=35 // pred_fallthru
          _
        %s225 = sand.u32 %s30, 1
        %s226 = scalar_lea.sflag [#allocation4], %s225
        %s227 = sand.u32 %s30, 1
        %s228 = smul.addr %s227, 16
        %s229 = scalar_lea.vmem [#allocation3], %s228
        %p230 = pneg %p43
        %p231 = pneg %p40
        %p232 = pneg %p64
        %p233 = pneg %p61
        %p234 = pneg %p85
        %p235 = pneg %p82
        %p236 = pneg %p106
        %p237 = pneg %p103
        %p238 = pneg %p132
        %p239 = pneg %p129
        %s240 = sand.u32 %s119, 1
        %s241 = scalar_lea.sflag [#allocation5], %s240
        %s242 = sand.u32 %s119, 1
        %s243 = smul.addr %s242, 16
        %s244 = scalar_lea.vmem [#allocation9], %s243
        %vm245 = vcmask 581632
        %246 = vst.msk [vmem:[#allocation2] sm:$0x1] %vm245, 0.0
        %247 = vst.msk [vmem:[#allocation2 + $0x11] sm:$0x1] %vm245, 0.0
        %vm248 = vcmask 31744
        %249 = vst.msk [vmem:[#allocation2] sm:$0xff] %vm248, 0.0
        %250 = vst.msk [vmem:[#allocation2 + $0x8] sm:$0xff] %vm248, 0.0
        %vm251 = vcmask 25600
        %252 = vst.msk [vmem:[#allocation2 + $0x10] sm:$0x3] %vm251, 0.0
        %vm253 = vcmask 589344
        %254 = vst.msk [vmem:[#allocation2] sm:$0xff] %vm253, 0.0
        %255 = vst.msk [vmem:[#allocation2 + $0x8] sm:$0xff] %vm253, 0.0
        %vm256 = vcmask 583200
        %257 = vst.msk [vmem:[#allocation2 + $0x10] sm:$0x3] %vm256, 0.0
        %v258 = vld [vmem:[%s212] sm:$0xff]
        %v259 = vld [vmem:[%s212 + $0x8] sm:$0xff]
        %262 = vrot.lane.b32.xlu0 %v258, 4
        %v263 = vpop.permute.xlu0 %262
        %264 = vrot.lane.b32.xlu0 %v259, 4
        %v265 = vpop.permute.xlu0 %264
        %vm268 = vcmask 556064
        %269 = vst.msk [vmem:[#allocation2 + $0x1] sm:$0xff] %vm268, %v263
        %270 = vst.msk [vmem:[#allocation2 + $0x9] sm:$0xff] %vm268, %v265
        %v271 = vld [vmem:[#allocation2] sm:$0xff]
        %v272 = vld [vmem:[#allocation2 + $0x8] sm:$0xff]
        %v273 = vld [vmem:[#allocation6] sm:$0x1]
        %v274 = vlaneseq
        %v275 = vshrl.u32 %v274, 7
        %v276 = vsub.s32 0, %v275
        %v277 = vrot.slane %v273, %v276
        %v278 = vmul.f32 %v271, %v277
        %v279 = vmul.f32 %v272, %v277
        %v280 = vld [vmem:[#allocation6 + $0x1] sm:$0x1]
        %v281 = vlaneseq
        %v282 = vshrl.u32 %v281, 7
        %v283 = vsub.s32 0, %v282
        %v284 = vrot.slane %v280, %v283
        %286 = vrot.lane.b32.xlu0 %v284, 4
        %v287 = vpop.permute.xlu0 %286
        %v289 = vmul.f32 %v271, %v287
        %v290 = vmul.f32 %v272, %v287
        %293 = vrot.lane.b32.xlu0 %v289, 124
        %v294 = vpop.permute.xlu0 %293
        %295 = vrot.lane.b32.xlu0 %v290, 124
        %v296 = vpop.permute.xlu0 %295
        %v299 = vadd.f32 %v278, %v294
        %v300 = vadd.f32 %v279, %v296
        %v301 = vld [vmem:[#allocation6 + $0x2] sm:$0x1]
        %v302 = vlaneseq
        %v303 = vshrl.u32 %v302, 7
        %v304 = vsub.s32 0, %v303
        %v305 = vrot.slane %v301, %v304
        %307 = vrot.lane.b32.xlu0 %v305, 8
        %v308 = vpop.permute.xlu0 %307
        %v310 = vmul.f32 %v271, %v308
        %v311 = vmul.f32 %v272, %v308
        %314 = vrot.lane.b32.xlu0 %v310, 120
        %v315 = vpop.permute.xlu0 %314
        %316 = vrot.lane.b32.xlu0 %v311, 120
        %v317 = vpop.permute.xlu0 %316
        %v320 = vadd.f32 %v299, %v315
        %v321 = vadd.f32 %v300, %v317
        %v322 = vld [vmem:[#allocation2 + $0x1] sm:$0xff]
        %v323 = vld [vmem:[#allocation2 + $0x9] sm:$0xff]
        %v324 = vld [vmem:[#allocation6 + $0x3] sm:$0x1]
        %v325 = vlaneseq
        %v326 = vshrl.u32 %v325, 7
        %v327 = vsub.s32 0, %v326
        %v328 = vrot.slane %v324, %v327
        %v329 = vmul.f32 %v322, %v328
        %v330 = vmul.f32 %v323, %v328
        %v331 = vadd.f32 %v320, %v329
        %v332 = vadd.f32 %v321, %v330
        %v333 = vld [vmem:[#allocation6 + $0x4] sm:$0x1]
        %v334 = vlaneseq
        %v335 = vshrl.u32 %v334, 7
        %v336 = vsub.s32 0, %v335
        %v337 = vrot.slane %v333, %v336
        %339 = vrot.lane.b32.xlu0 %v337, 4
        %v340 = vpop.permute.xlu0 %339
        %v342 = vmul.f32 %v322, %v340
        %v343 = vmul.f32 %v323, %v340
        %346 = vrot.lane.b32.xlu0 %v342, 124
        %v347 = vpop.permute.xlu0 %346
        %348 = vrot.lane.b32.xlu0 %v343, 124
        %v349 = vpop.permute.xlu0 %348
        %v352 = vadd.f32 %v331, %v347
        %v353 = vadd.f32 %v332, %v349
        %v354 = vld [vmem:[#allocation6 + $0x5] sm:$0x1]
        %v355 = vlaneseq
        %v356 = vshrl.u32 %v355, 7
        %v357 = vsub.s32 0, %v356
        %v358 = vrot.slane %v354, %v357
        %360 = vrot.lane.b32.xlu0 %v358, 8
        %v361 = vpop.permute.xlu0 %360
        %v363 = vmul.f32 %v322, %v361
        %v364 = vmul.f32 %v323, %v361
        %367 = vrot.lane.b32.xlu0 %v363, 120
        %v368 = vpop.permute.xlu0 %367
        %369 = vrot.lane.b32.xlu0 %v364, 120
        %v370 = vpop.permute.xlu0 %369
        %v373 = vadd.f32 %v352, %v368
        %v374 = vadd.f32 %v353, %v370
        %v375 = vld [vmem:[#allocation2 + $0x2] sm:$0xff]
        %v376 = vld [vmem:[#allocation2 + $0xa] sm:$0xff]
        %v377 = vld [vmem:[#allocation6 + $0x6] sm:$0x1]
        %v378 = vlaneseq
        %v379 = vshrl.u32 %v378, 7
        %v380 = vsub.s32 0, %v379
        %v381 = vrot.slane %v377, %v380
        %v382 = vmul.f32 %v375, %v381
        %v383 = vmul.f32 %v376, %v381
        %v384 = vadd.f32 %v373, %v382
        %v385 = vadd.f32 %v374, %v383
        %v386 = vld [vmem:[#allocation6 + $0x7] sm:$0x1]
        %v387 = vlaneseq
        %v388 = vshrl.u32 %v387, 7
        %v389 = vsub.s32 0, %v388
        %v390 = vrot.slane %v386, %v389
        %392 = vrot.lane.b32.xlu0 %v390, 4
        %v393 = vpop.permute.xlu0 %392
        %v395 = vmul.f32 %v375, %v393
        %v396 = vmul.f32 %v376, %v393
        %399 = vrot.lane.b32.xlu0 %v395, 124
        %v400 = vpop.permute.xlu0 %399
        %401 = vrot.lane.b32.xlu0 %v396, 124
        %v402 = vpop.permute.xlu0 %401
        %v405 = vadd.f32 %v384, %v400
        %v406 = vadd.f32 %v385, %v402
        %v407 = vld [vmem:[#allocation6 + $0x8] sm:$0x1]
        %v408 = vlaneseq
        %v409 = vshrl.u32 %v408, 7
        %v410 = vsub.s32 0, %v409
        %v411 = vrot.slane %v407, %v410
        %413 = vrot.lane.b32.xlu0 %v411, 8
        %v414 = vpop.permute.xlu0 %413
        %v416 = vmul.f32 %v375, %v414
        %v417 = vmul.f32 %v376, %v414
        %420 = vrot.lane.b32.xlu0 %v416, 120
        %v421 = vpop.permute.xlu0 %420
        %422 = vrot.lane.b32.xlu0 %v417, 120
        %v423 = vpop.permute.xlu0 %422
        %v426 = vadd.f32 %v405, %v421
        %v427 = vadd.f32 %v406, %v423
        %v428 = vld [vmem:[#allocation8] sm:$0xff]
        %v429 = vld [vmem:[#allocation8 + $0x8] sm:$0xff]
        %v430 = vld [vmem:[#allocation8 + $0x10] sm:$0xff]
        %v431 = vld [vmem:[#allocation8 + $0x18] sm:$0xff]
        %v432 = vld [vmem:[#allocation8 + $0x20] sm:$0xff]
        %v433 = vld [vmem:[#allocation8 + $0x28] sm:$0xff]
        %v434 = vld [vmem:[#allocation8 + $0x30] sm:$0xff]
        %v435 = vld [vmem:[#allocation8 + $0x38] sm:$0xff]
        %v436 = vld [vmem:[%s3] sm:$0x1]
        %v438 = vlaneseq
        %v439 = vshrl.u32 %v438, 7
        %v440 = vsub.s32 0, %v439
        %v441 = vrot.slane %v436, %v440
        %vm443 = vcmask 523264
        %v445 = vsel %vm443, %v426, 0
        %v448 = vsel %vm443, %v427, 0
        %450 = vmatprep.subr.mxu0 0.0
        %451 = vmatpush1.msra.mxu0 %v428
        %452 = vmatprep.subr.mxu0 0.0
        %453 = vmatpush1.msra.mxu0 %v429
        %454 = vmatprep.subr.mxu0 0.0
        %455 = vmatpush1.msra.mxu0 %v430
        %456 = vmatprep.subr.mxu0 0.0
        %457 = vmatpush1.msra.mxu0 %v431
        %458 = vmatprep.subr.mxu0 0.0
        %459 = vmatpush1.msra.mxu0 %v432
        %460 = vmatprep.subr.mxu0 0.0
        %461 = vmatpush1.msra.mxu0 %v433
        %462 = vmatprep.subr.mxu0 0.0
        %463 = vmatpush1.msra.mxu0 %v434
        %464 = vmatprep.subr.mxu0 0.0
        %465 = vmatpush1.msra.mxu0 %v435
        %466 = vmatprep.subr.mxu0 0.0
        %467 = vmatpush1.msra.mxu0 0.0
        %468 = vmatprep.subr.mxu0 0.0
        %469 = vmatpush1.msra.mxu0 0.0
        %470 = vmatprep.subr.mxu0 0.0
        %471 = vmatpush1.msra.mxu0 0.0
        %472 = vmatprep.subr.mxu0 0.0
        %473 = vmatpush1.msra.mxu0 0.0
        %474 = vmatprep.subr.mxu0 0.0
        %475 = vmatpush1.msra.mxu0 0.0
        %476 = vmatprep.subr.mxu0 0.0
        %477 = vmatpush1.msra.mxu0 0.0
        %478 = vmatprep.subr.mxu0 0.0
        %479 = vmatpush1.msra.mxu0 0.0
        %480 = vmatprep.subr.mxu0 0.0
        %481 = vmatpush1.msra.mxu0 0.0
        %482 = vmatprep.subr.mxu0 0.0
        %483 = vmatpush1.msra.mxu0 0.0
        %484 = vmatprep.subr.mxu0 0.0
        %485 = vmatpush1.msra.mxu0 0.0
        %486 = vmatprep.subr.mxu0 0.0
        %487 = vmatpush1.msra.mxu0 0.0
        %488 = vmatprep.subr.mxu0 0.0
        %489 = vmatpush1.msra.mxu0 0.0
        %490 = vmatprep.subr.mxu0 0.0
        %491 = vmatpush1.msra.mxu0 0.0
        %492 = vmatprep.subr.mxu0 0.0
        %493 = vmatpush1.msra.mxu0 0.0
        %494 = vmatprep.subr.mxu0 0.0
        %495 = vmatpush1.msra.mxu0 0.0
        %496 = vmatprep.subr.mxu0 0.0
        %497 = vmatpush1.msra.mxu0 0.0
        %498 = vmatprep.subr.mxu0 0.0
        %499 = vmatpush1.msra.mxu0 0.0
        %500 = vmatprep.subr.mxu0 0.0
        %501 = vmatpush1.msra.mxu0 0.0
        %502 = vmatprep.subr.mxu0 0.0
        %503 = vmatpush1.msra.mxu0 0.0
        %504 = vmatprep.subr.mxu0 0.0
        %505 = vmatpush1.msra.mxu0 0.0
        %506 = vmatprep.subr.mxu0 0.0
        %507 = vmatpush1.msra.mxu0 0.0
        %508 = vmatprep.subr.mxu0 0.0
        %509 = vmatpush1.msra.mxu0 0.0
        %510 = vmatprep.subr.mxu0 0.0
        %511 = vmatpush1.msra.mxu0 0.0
        %512 = vmatprep.subr.mxu0 0.0
        %513 = vmatpush1.msra.mxu0 0.0
        %514 = vmatprep.mubr.f32.mxu0 0.0
        %515 = vmatmul.mubr.f32.gmra.mrb[0].mxu0 %v445
        %v516 = vpop.f32.mrb[0].mxu0
        %v517 = vadd.f32 %v441, %v516
        %v518 = vpop.f32.mrb[0].mxu0
        %519 = vmatprep.mubr.f32.mxu0 0.0
        %520 = vmatmul.mubr.f32.gmra.mrb[0].mxu0 %v448
        %v521 = vpop.f32.mrb[0].mxu0
        %v522 = vadd.f32 %v441, %v521
        %v523 = vpop.f32.mrb[0].mxu0
        %524 = vdwg.mxu0
        %v525 = vmax.f32 %v517, 0.0
        %v526 = vmax.f32 %v522, 0.0
        %527 = vst [vmem:[%s244] sm:$0xff] %v525
        %528 = vst [vmem:[%s244 + $0x8] sm:$0xff] %v526
        %s529 = sand.u32 %s119, 1
        %s530 = scalar_lea.sflag [#allocation5], %s529
        %s531 = sand.u32 %s119, 1
        %s532 = smul.addr %s531, 16
        %s533 = scalar_lea.vmem [#allocation9], %s532
        // Predicated region
        $region49: #{tpu_custom_call.1} parent=35 // pred_check
          %p534 = pneg %p129
        $region50: #{tpu_custom_call.1} parent=35 // pred_check_branch
          %536 = sbr.rel (%p534) target = $region52
        $region51: #{tpu_custom_call.1} parent=35 // pred_region
          %s538 = ssub.s32 256, 256
          %539 = vsyncadd %s530, %s538
          %s540 = smul.addr %s22, 2
          %s541 = smul.addr %s540, 128
          %s542 = scalar_lea.hbm %s4, %s541
          %s543 = sshll.u32 %s533, 4
          %s544 = int_to_ptr.vmem [resolvable:$true] %s543
          %549 = dma.vmem_to_hbm [thread:$0]  %s544, 256, %s542, %s530, 128, 128, 8
        $region52: #{tpu_custom_call.1} parent=35 // pred_fallthru
          _
      $region36: #{tpu_custom_call.1} parent=5 // pred_fallthru
        _
      %p550 = scmp.le.s32.totalorder 2, %s17
      // Predicated region
      $region53: #{tpu_custom_call.1} parent=5 // pred_check
        %p551 = pneg %p550
      $region54: #{tpu_custom_call.1} parent=5 // pred_check_branch
        %553 = sbr.rel (%p551) target = $region56
      $region55: #{tpu_custom_call.1} parent=5 // pred_region
        %s554 = ssub.s32 %s17, 2
        // Predicated region
        $region57: #{tpu_custom_call.1} parent=55 // pred_check
          %p555 = pneg %p135
        $region58: #{tpu_custom_call.1} parent=55 // pred_check_branch
          %557 = sbr.rel (%p555) target = $region60
        $region59: #{tpu_custom_call.1} parent=55 // pred_region
          %s558 = sand.u32 %s120, 1
          %s559 = scalar_lea.sflag [#allocation5], %s558
          %s560 = sand.u32 %s120, 1
          %s561 = smul.addr %s560, 16
          %s562 = scalar_lea.vmem [#allocation9], %s561
          %563 = dma.done %s559, 256
        $region60: #{tpu_custom_call.1} parent=55 // pred_fallthru
          _
      $region56: #{tpu_custom_call.1} parent=5 // pred_fallthru
        _
    $region6: #{tpu_custom_call.1} parent=1 // loop_footer
      %s21 = sadd.s32 1, %s17
    $region7: #{tpu_custom_call.1} parent=1 // loop_footer_branch
      %16 = sbr.rel target = $region3
    $region8: #{tpu_custom_call.1} parent=1 // loop_exit
      _
    %564 = vsyncpa [#allocation4], 1
    %s565 = scalar_lea.sflag [#allocation4], 1
    %566 = vsyncpa %s565, 1
    %567 = vsyncpa [#allocation7], 1
    %568 = vsyncpa [#allocation5], 1
    %s569 = scalar_lea.sflag [#allocation5], 1
    %570 = vsyncpa %s569, 1

</llo_original>
